<compile_context>
chip_gen: v7x
topology: tpu7x:2x2x1
jax: 0.10.0
libtpu: 0.0.40
codegen_flags: <defaults>
</compile_context>

<pallas_src>
import numpy as np
import jax
import jax.numpy as jnp
from jax import lax
from jax.experimental import pallas as pl
from jax.experimental.pallas import tpu as pltpu


STATE_DIM = 4      # CartPole-v1 observation_space.shape[0]
ACTION_DIM = 2     # CartPole-v1 action_space.n
HIDDEN = 128
HEAD_PAD = 8       # fused head width: actor lanes + critic lane + zero pad
assert ACTION_DIM + 1 <= HEAD_PAD, "fused-head packing needs ACTION_DIM+1 <= HEAD_PAD"

SINGLE_STEP_MAX_B = 2048   # padded batch up to this: one grid step (no pipeline overhead)
MAX_TILE_B = 4096          # beyond that: even number of steps, tile <= this


def _round_up(x, m):
    return (x + m - 1) // m * m


def actor_critic_kernel(state_ref, w1_ref, b1_ref, wh_ref, bh_ref, out_ref):
    """One batch tile: fc1 + ReLU + fused (actor|critic) head + masked softmax.

    Shapes seen by the kernel (one grid step):
      state_ref: [TILE_B, STATE_DIM]
      w1_ref:    [STATE_DIM, HIDDEN]   b1_ref: [1, HIDDEN]
      wh_ref:    [HIDDEN, HEAD_PAD]    bh_ref: [1, HEAD_PAD]
      out_ref:   [TILE_B, HEAD_PAD]    lanes 0:ACTION_DIM -> probs,
                                       lane ACTION_DIM -> value, rest zeros.
    """
    x = state_ref[...]

    # fc1 + ReLU -> hidden activations [TILE_B, HIDDEN].  K=4 stays on the
    # MXU: it is ~3% of the head matmul's work and the heads depend on it, so
    # moving it to VPU broadcast-FMAs would buy no overlap.
    h = jnp.dot(x, w1_ref[...], preferred_element_type=jnp.float32) + b1_ref[...]
    h = jnp.maximum(h, 0.0)

    # single fused matmul for both heads: [TILE_B, HEAD_PAD]
    heads = jnp.dot(h, wh_ref[...], preferred_element_type=jnp.float32) + bh_ref[...]

    # numerically-stable softmax restricted to the actor lanes; the mask only
    # depends on the lane index, so build a (1, HEAD_PAD) row and broadcast.
    lane = lax.broadcasted_iota(jnp.int32, (1, HEAD_PAD), 1)
    is_action = lane < ACTION_DIM
    neg_inf = jnp.float32(-jnp.inf)
    m = jnp.max(jnp.where(is_action, heads, neg_inf), axis=-1, keepdims=True)
    e = jnp.exp(jnp.where(is_action, heads - m, neg_inf))      # exp(-inf) == 0
    denom = jnp.sum(e, axis=-1, keepdims=True)
    probs = e * pl.reciprocal(denom, approx=True)   # EUP vrcp; RL sampling
                                                    # does not need 1e-5 probs

    # action lanes = probs; lane ACTION_DIM keeps the critic value; padded
    # lanes stay exactly zero (zero-padded fused weights/bias).
    out_ref[...] = jnp.where(is_action, probs, heads)


def pack_head_params(wa, ba, wc, bc):
    """Pack actor/critic weights into one fused [HIDDEN, HEAD_PAD] head.

    Call ONCE at init / after a parameter update -- not per forward call.
    """
    pad = HEAD_PAD - ACTION_DIM - 1
    w_heads = jnp.concatenate(
        [wa, wc, jnp.zeros((HIDDEN, pad), jnp.float32)], axis=1)
    b_heads = jnp.concatenate(
        [ba, bc, jnp.zeros((1, pad), jnp.float32)], axis=1)
    return w_heads, b_heads


def actor_critic_forward_packed(state, w1, b1, w_heads, b_heads, *,
                                single_step_max_b=SINGLE_STEP_MAX_B,
                                max_tile_b=MAX_TILE_B):
    """ActorCritic forward pass using pre-packed fused head weights.

    Args (float32):
      state:   [B, STATE_DIM]
      w1:      [STATE_DIM, HIDDEN],  b1:      [1, HIDDEN]
      w_heads: [HIDDEN, HEAD_PAD],   b_heads: [1, HEAD_PAD]
    Returns:
      (action_probs [B, ACTION_DIM], value [B, 1])
    """
    B = state.shape[0]
    b_pad = _round_up(B, 8)

    if b_pad <= single_step_max_b:
        # Per-env-step / small-batch path: one grid step, no per-step overhead.
        n_steps, tile = 1, b_pad
    else:
        # Large batch: an even number of grid steps so the "parallel" batch
        # axis shards across both TensorCores on v7x; tile capped at
        # max_tile_b (~10 MiB VMEM incl. lane-padded state/output buffers).
        n_steps = 2 * pl.cdiv(b_pad, 2 * max_tile_b)
        tile = _round_up(pl.cdiv(b_pad, n_steps), 8)
        b_pad = tile * n_steps

    if b_pad != B:
        state = jnp.pad(state, ((0, b_pad - B), (0, 0)))

    out = pl.pallas_call(
        actor_critic_kernel,
        out_shape=jax.ShapeDtypeStruct((b_pad, HEAD_PAD), jnp.float32),
        grid=(n_steps,),
        in_specs=[
            pl.BlockSpec((tile, STATE_DIM), lambda i: (i, 0)),     # streamed
            pl.BlockSpec((STATE_DIM, HIDDEN), lambda i: (0, 0)),   # resident
            pl.BlockSpec((1, HIDDEN), lambda i: (0, 0)),           # resident
            pl.BlockSpec((HIDDEN, HEAD_PAD), lambda i: (0, 0)),    # resident
            pl.BlockSpec((1, HEAD_PAD), lambda i: (0, 0)),         # resident
        ],
        out_specs=pl.BlockSpec((tile, HEAD_PAD), lambda i: (i, 0)),
        compiler_params=pltpu.CompilerParams(
            dimension_semantics=("parallel",)),
    )(state, w1, b1, w_heads, b_heads)

    probs = out[:B, :ACTION_DIM]
    value = out[:B, ACTION_DIM:ACTION_DIM + 1]
    return probs, value


def actor_critic_forward(state, w1, b1, wa, ba, wc, bc, **kwargs):
    """Convenience wrapper (packs the heads per call; prefer pre-packing)."""
    w_heads, b_heads = pack_head_params(wa, ba, wc, bc)
    return actor_critic_forward_packed(state, w1, b1, w_heads, b_heads, **kwargs)


def init_params(key):
    """Deterministic init mirroring nn.Linear's default U(-1/sqrt(fan_in), +)."""
    ks = jax.random.split(key, 6)

    def linear(kw, kb, fan_in, fan_out):
        bound = 1.0 / np.sqrt(fan_in)
        w = jax.random.uniform(kw, (fan_in, fan_out), jnp.float32, -bound, bound)
        b = jax.random.uniform(kb, (1, fan_out), jnp.float32, -bound, bound)
        return w, b

    w1, b1 = linear(ks[0], ks[1], STATE_DIM, HIDDEN)
    wa, ba = linear(ks[2], ks[3], HIDDEN, ACTION_DIM)
    wc, bc = linear(ks[4], ks[5], HIDDEN, 1)
    return w1, b1, wa, ba, wc, bc


def reference_forward(state, w1, b1, wa, ba, wc, bc):
    h = jnp.maximum(state @ w1 + b1, 0.0)
    logits = h @ wa + ba
    probs = jax.nn.softmax(logits, axis=-1)
    value = h @ wc + bc
    return probs, value


if __name__ == "__main__":
    key = jax.random.PRNGKey(0)
    k_state, k_state2, k_params = jax.random.split(key, 3)
    w1, b1, wa, ba, wc, bc = init_params(k_params)

    # Pack the fused head ONCE (hoisted out of the per-call path).
    w_heads, b_heads = pack_head_params(wa, ba, wc, bc)

    # tiny per-env-step batch (the original agent use case; single grid step)
    batch = 2
    state = jax.random.normal(k_state, (batch, STATE_DIM), jnp.float32)
    probs, value = actor_critic_forward_packed(state, w1, b1, w_heads, b_heads)
    jax.block_until_ready((probs, value))

    ref_probs, ref_value = reference_forward(state, w1, b1, wa, ba, wc, bc)
    assert probs.shape == (batch, ACTION_DIM)
    assert value.shape == (batch, 1)
    # probs use the approx EUP reciprocal -> loosened tolerance; value is exact f32.
    np.testing.assert_allclose(np.asarray(probs), np.asarray(ref_probs),
                               rtol=2e-3, atol=2e-3)
    np.testing.assert_allclose(np.asarray(value), np.asarray(ref_value),
                               rtol=1e-5, atol=1e-5)
    np.testing.assert_allclose(np.asarray(probs).sum(axis=-1),
                               np.ones(batch), rtol=2e-3, atol=2e-3)

    # larger batch, forced onto the multi-step path (even split for v7x
    # megacore + batch padding + per-tile streaming)
    batch2 = 1000
    state2 = jax.random.normal(k_state2, (batch2, STATE_DIM), jnp.float32)
    probs2, value2 = actor_critic_forward_packed(
        state2, w1, b1, w_heads, b_heads, single_step_max_b=256)
    jax.block_until_ready((probs2, value2))
    ref_probs2, ref_value2 = reference_forward(state2, w1, b1, wa, ba, wc, bc)
    np.testing.assert_allclose(np.asarray(probs2), np.asarray(ref_probs2),
                               rtol=2e-3, atol=2e-3)
    np.testing.assert_allclose(np.asarray(value2), np.asarray(ref_value2),
                               rtol=1e-5, atol=1e-5)

    print("KERNEL_OK")
</pallas_src>

<mosaic_0001>
module attributes {stable_mosaic.version = 11 : i64} {
  func.func @actor_critic_kernel(%arg0: i32, %arg1: memref<8x4xf32, #tpu.memory_space<vmem>>, %arg2: memref<4x128xf32, #tpu.memory_space<vmem>>, %arg3: memref<1x128xf32, #tpu.memory_space<vmem>>, %arg4: memref<128x8xf32, #tpu.memory_space<vmem>>, %arg5: memref<1x8xf32, #tpu.memory_space<vmem>>, %arg6: memref<8x8xf32, #tpu.memory_space<vmem>>) attributes {dimension_semantics = [#tpu.dimension_semantics<parallel>], iteration_bounds = array<i64: 1>, scalar_prefetch = 0 : i64, scratch_operands = 0 : i64, tpu.core_type = #tpu.core_type<tc>, window_params = [{transform_indices = @transform_0, window_bounds = array<i64: 8, 4>}, {pipeline_mode = #tpu.pipeline_mode<synchronous>, transform_indices = @transform_1, window_bounds = array<i64: 4, 128>}, {pipeline_mode = #tpu.pipeline_mode<synchronous>, transform_indices = @transform_2, window_bounds = array<i64: 1, 128>}, {pipeline_mode = #tpu.pipeline_mode<synchronous>, transform_indices = @transform_3, window_bounds = array<i64: 128, 8>}, {pipeline_mode = #tpu.pipeline_mode<synchronous>, transform_indices = @transform_4, window_bounds = array<i64: 1, 8>}, {transform_indices = @transform_5, window_bounds = array<i64: 8, 8>}]} {
    %c0 = arith.constant 0 : index
    %c0_0 = arith.constant 0 : index
    %0 = vector.load %arg1[%c0, %c0_0] : memref<8x4xf32, #tpu.memory_space<vmem>>, vector<8x4xf32>
    %c0_1 = arith.constant 0 : index
    %c0_2 = arith.constant 0 : index
    %1 = vector.load %arg2[%c0_1, %c0_2] : memref<4x128xf32, #tpu.memory_space<vmem>>, vector<4x128xf32>
    %cst = arith.constant dense<0.000000e+00> : vector<8x128xf32>
    %2 = tpu.matmul %0, %1, %cst {dimension_numbers = #tpu.dot_dimension_numbers<[1], [0], [0], [1], [0, 0, 1, 1], [], []>} : vector<8x4xf32>, vector<4x128xf32>, vector<8x128xf32> -> vector<8x128xf32>
    %c0_3 = arith.constant 0 : index
    %c0_4 = arith.constant 0 : index
    %3 = vector.load %arg3[%c0_3, %c0_4] : memref<1x128xf32, #tpu.memory_space<vmem>>, vector<1x128xf32>
    %4 = vector.broadcast %3 : vector<1x128xf32> to vector<8x128xf32>
    %5 = arith.addf %2, %4 : vector<8x128xf32>
    %cst_5 = arith.constant 0.000000e+00 : f32
    %6 = vector.broadcast %cst_5 : f32 to vector<8x128xf32>
    %7 = arith.maximumf %5, %6 : vector<8x128xf32>
    %c0_6 = arith.constant 0 : index
    %c0_7 = arith.constant 0 : index
    %8 = vector.load %arg4[%c0_6, %c0_7] : memref<128x8xf32, #tpu.memory_space<vmem>>, vector<128x8xf32>
    %cst_8 = arith.constant dense<0.000000e+00> : vector<8x8xf32>
    %9 = tpu.matmul %7, %8, %cst_8 {dimension_numbers = #tpu.dot_dimension_numbers<[1], [0], [0], [1], [0, 0, 1, 1], [], []>} : vector<8x128xf32>, vector<128x8xf32>, vector<8x8xf32> -> vector<8x8xf32>
    %c0_9 = arith.constant 0 : index
    %c0_10 = arith.constant 0 : index
    %10 = vector.load %arg5[%c0_9, %c0_10] : memref<1x8xf32, #tpu.memory_space<vmem>>, vector<1x8xf32>
    %11 = vector.broadcast %10 : vector<1x8xf32> to vector<8x8xf32>
    %12 = arith.addf %9, %11 : vector<8x8xf32>
    %13 = tpu.iota {dimensions = array<i32: 1>} : vector<1x8xi32>
    %c2_i32 = arith.constant 2 : i32
    %14 = vector.broadcast %c2_i32 : i32 to vector<1x8xi32>
    %15 = arith.cmpi slt, %13, %14 : vector<1x8xi32>
    %cst_11 = arith.constant 0xFF800000 : f32
    %16 = vector.shape_cast %15 : vector<1x8xi1> to vector<1x8xi1>
    %17 = vector.broadcast %16 : vector<1x8xi1> to vector<8x8xi1>
    %18 = vector.broadcast %cst_11 : f32 to vector<8x8xf32>
    %19 = arith.select %17, %12, %18 : vector<8x8xi1>, vector<8x8xf32>
    %cst_12 = arith.constant dense<0xFF800000> : vector<8xf32>
    %20 = vector.multi_reduction <maximumf>, %19, %cst_12 [1] : vector<8x8xf32> to vector<8xf32>
    %21 = vector.shape_cast %20 : vector<8xf32> to vector<8x1xf32>
    %22 = vector.broadcast %21 : vector<8x1xf32> to vector<8x8xf32>
    %23 = arith.subf %12, %22 : vector<8x8xf32>
    %cst_13 = arith.constant 0xFF800000 : f32
    %24 = vector.shape_cast %15 : vector<1x8xi1> to vector<1x8xi1>
    %25 = vector.broadcast %24 : vector<1x8xi1> to vector<8x8xi1>
    %26 = vector.broadcast %cst_13 : f32 to vector<8x8xf32>
    %27 = arith.select %25, %23, %26 : vector<8x8xi1>, vector<8x8xf32>
    %28 = math.exp %27 : vector<8x8xf32>
    %cst_14 = arith.constant dense<0.000000e+00> : vector<8xf32>
    %29 = vector.multi_reduction <add>, %28, %cst_14 [1] : vector<8x8xf32> to vector<8xf32>
    %30 = vector.shape_cast %29 : vector<8xf32> to vector<8x1xf32>
    %31 = tpu.reciprocal %30 {approx = true} : vector<8x1xf32> -> vector<8x1xf32>
    %32 = vector.broadcast %31 : vector<8x1xf32> to vector<8x8xf32>
    %33 = arith.mulf %28, %32 : vector<8x8xf32>
    %34 = vector.shape_cast %15 : vector<1x8xi1> to vector<1x8xi1>
    %35 = vector.broadcast %34 : vector<1x8xi1> to vector<8x8xi1>
    %36 = arith.select %35, %33, %12 : vector<8x8xi1>, vector<8x8xf32>
    %c0_15 = arith.constant 0 : index
    %c0_16 = arith.constant 0 : index
    %37 = vector.load %arg6[%c0_15, %c0_16] : memref<8x8xf32, #tpu.memory_space<vmem>>, vector<8x8xf32>
    tpu.vector_store %arg6[%c0_15, %c0_16], %36 {strides = array<i32>} : memref<8x8xf32, #tpu.memory_space<vmem>>, vector<8x8xf32>,
    return
  }
  func.func @transform_0(%arg0: i32) -> (i32, i32) {
    %c0_i32 = arith.constant 0 : i32
    %c0_i32_0 = arith.constant 0 : i32
    return %arg0, %c0_i32 : i32, i32
  }
  func.func @transform_1(%arg0: i32) -> (i32, i32) {
    %c0_i32 = arith.constant 0 : i32
    %c0_i32_0 = arith.constant 0 : i32
    %c0_i32_1 = arith.constant 0 : i32
    return %c0_i32, %c0_i32_0 : i32, i32
  }
  func.func @transform_2(%arg0: i32) -> (i32, i32) {
    %c0_i32 = arith.constant 0 : i32
    %c0_i32_0 = arith.constant 0 : i32
    %c0_i32_1 = arith.constant 0 : i32
    return %c0_i32, %c0_i32_0 : i32, i32
  }
  func.func @transform_3(%arg0: i32) -> (i32, i32) {
    %c0_i32 = arith.constant 0 : i32
    %c0_i32_0 = arith.constant 0 : i32
    %c0_i32_1 = arith.constant 0 : i32
    return %c0_i32, %c0_i32_0 : i32, i32
  }
  func.func @transform_4(%arg0: i32) -> (i32, i32) {
    %c0_i32 = arith.constant 0 : i32
    %c0_i32_0 = arith.constant 0 : i32
    %c0_i32_1 = arith.constant 0 : i32
    return %c0_i32, %c0_i32_0 : i32, i32
  }
  func.func @transform_5(%arg0: i32) -> (i32, i32) {
    %c0_i32 = arith.constant 0 : i32
    %c0_i32_0 = arith.constant 0 : i32
    return %arg0, %c0_i32 : i32, i32
  }
}

</mosaic_0001>

<llo_original>
// kernel: tpu_custom_call.1
$region0: #{tpu_custom_call.1}
  #allocation0 [shape = 'u32[]', space=smem, size = 0x4, offset = 0x4, fixed_abs, tag = 'smem constant byte address 0x4 - core index']
  #allocation1 [shape = 'u32[144,128]{1,0:T(1,128)}', space=vmem, size = 0x12000, scoped, tag = 'internal scratch']
  %s0 = inlined_call_operand.vmem [shape: f32[8,4], index: 0, kind: input, shape index: {}]
  %s1 = inlined_call_operand.vmem [shape: f32[4,128], index: 1, kind: input, shape index: {}]
  %s2 = inlined_call_operand.vmem [shape: f32[1,128], index: 2, kind: input, shape index: {}]
  %s3 = inlined_call_operand.vmem [shape: f32[128,8], index: 3, kind: input, shape index: {}]
  %s4 = inlined_call_operand.vmem [shape: f32[1,8], index: 4, kind: input, shape index: {}]
  %s5 = inlined_call_operand.hbm [shape: f32[8,8], index: 5, kind: output, shape index: {}]
  %s6 = sld [smem:[#allocation0]]
  $region30: #{tpu_custom_call.1} parent=0
    _
  %s8 = ssub.s32 1, %s6
  %s9 = scalar_select 0, %s8, %s6
  $region1: #{tpu_custom_call.1} parent=0
    #allocation2 [shape = 'u8[4096]{0}', space=vmem, size = 0x1000, scoped, tag = 'output window, operand 0, single buffered']
    #allocation3 [shape = 's32[1]{0}', space=sflag, size = 0x4, scoped, tag = 'scoped memory for tpu_custom_call.1']
    %10 = vsyncpa [#allocation3], 0
    // Predicated region
    $region2: #{tpu_custom_call.1} parent=1 // pred_check
      _
    $region3: #{tpu_custom_call.1} parent=1 // pred_check_branch
      %12 = sbr.rel (0) target = $region5
    $region4: #{tpu_custom_call.1} parent=1 // pred_region
      _
    $region5: #{tpu_custom_call.1} parent=1 // pred_fallthru
      _
    // Predicated region
    $region6: #{tpu_custom_call.1} parent=1 // pred_check
      _
    $region7: #{tpu_custom_call.1} parent=1 // pred_check_branch
      %14 = sbr.rel (0) target = $region9
    $region8: #{tpu_custom_call.1} parent=1 // pred_region
      _
    $region9: #{tpu_custom_call.1} parent=1 // pred_fallthru
      _
    // Predicated region
    $region10: #{tpu_custom_call.1} parent=1 // pred_check
      _
    $region11: #{tpu_custom_call.1} parent=1 // pred_check_branch
      %16 = sbr.rel (0) target = $region13
    $region12: #{tpu_custom_call.1} parent=1 // pred_region
      _
    $region13: #{tpu_custom_call.1} parent=1 // pred_fallthru
      _
    // Predicated region
    $region14: #{tpu_custom_call.1} parent=1 // pred_check
      _
    $region15: #{tpu_custom_call.1} parent=1 // pred_check_branch
      %18 = sbr.rel (0) target = $region17
    $region16: #{tpu_custom_call.1} parent=1 // pred_region
      _
    $region17: #{tpu_custom_call.1} parent=1 // pred_fallthru
      _
    // Predicated region
    $region18: #{tpu_custom_call.1} parent=1 // pred_check
      _
    $region19: #{tpu_custom_call.1} parent=1 // pred_check_branch
      %20 = sbr.rel (0) target = $region21
    $region20: #{tpu_custom_call.1} parent=1 // pred_region
      _
    $region21: #{tpu_custom_call.1} parent=1 // pred_fallthru
      _
    %v21 = vld [vmem:[%s0] sm:$0xff]
    %v22 = vld [vmem:[%s1] sm:$0xf]
    %v23 = vld [vmem:[%s2] sm:$0x1]
    %v25 = vlaneseq
    %v26 = vshrl.u32 %v25, 7
    %v27 = vsub.s32 0, %v26
    %v28 = vrot.slane %v23, %v27
    %vm30 = vcmask 31744
    %v32 = vsel %vm30, %v21, 0
    %vm34 = vcmask 1043456
    %v36 = vsel %vm34, %v22, 0
    %38 = vmatprep.subr.mxu0 0.0
    %39 = vmatpush1.msra.mxu0 %v36
    %40 = vmatprep.subr.mxu0 0.0
    %41 = vmatpush1.msra.mxu0 0.0
    %42 = vmatprep.subr.mxu0 0.0
    %43 = vmatpush1.msra.mxu0 0.0
    %44 = vmatprep.subr.mxu0 0.0
    %45 = vmatpush1.msra.mxu0 0.0
    %46 = vmatprep.subr.mxu0 0.0
    %47 = vmatpush1.msra.mxu0 0.0
    %48 = vmatprep.subr.mxu0 0.0
    %49 = vmatpush1.msra.mxu0 0.0
    %50 = vmatprep.subr.mxu0 0.0
    %51 = vmatpush1.msra.mxu0 0.0
    %52 = vmatprep.subr.mxu0 0.0
    %53 = vmatpush1.msra.mxu0 0.0
    %54 = vmatprep.subr.mxu0 0.0
    %55 = vmatpush1.msra.mxu0 0.0
    %56 = vmatprep.subr.mxu0 0.0
    %57 = vmatpush1.msra.mxu0 0.0
    %58 = vmatprep.subr.mxu0 0.0
    %59 = vmatpush1.msra.mxu0 0.0
    %60 = vmatprep.subr.mxu0 0.0
    %61 = vmatpush1.msra.mxu0 0.0
    %62 = vmatprep.subr.mxu0 0.0
    %63 = vmatpush1.msra.mxu0 0.0
    %64 = vmatprep.subr.mxu0 0.0
    %65 = vmatpush1.msra.mxu0 0.0
    %66 = vmatprep.subr.mxu0 0.0
    %67 = vmatpush1.msra.mxu0 0.0
    %68 = vmatprep.subr.mxu0 0.0
    %69 = vmatpush1.msra.mxu0 0.0
    %70 = vmatprep.subr.mxu0 0.0
    %71 = vmatpush1.msra.mxu0 0.0
    %72 = vmatprep.subr.mxu0 0.0
    %73 = vmatpush1.msra.mxu0 0.0
    %74 = vmatprep.subr.mxu0 0.0
    %75 = vmatpush1.msra.mxu0 0.0
    %76 = vmatprep.subr.mxu0 0.0
    %77 = vmatpush1.msra.mxu0 0.0
    %78 = vmatprep.subr.mxu0 0.0
    %79 = vmatpush1.msra.mxu0 0.0
    %80 = vmatprep.subr.mxu0 0.0
    %81 = vmatpush1.msra.mxu0 0.0
    %82 = vmatprep.subr.mxu0 0.0
    %83 = vmatpush1.msra.mxu0 0.0
    %84 = vmatprep.subr.mxu0 0.0
    %85 = vmatpush1.msra.mxu0 0.0
    %86 = vmatprep.subr.mxu0 0.0
    %87 = vmatpush1.msra.mxu0 0.0
    %88 = vmatprep.subr.mxu0 0.0
    %89 = vmatpush1.msra.mxu0 0.0
    %90 = vmatprep.subr.mxu0 0.0
    %91 = vmatpush1.msra.mxu0 0.0
    %92 = vmatprep.subr.mxu0 0.0
    %93 = vmatpush1.msra.mxu0 0.0
    %94 = vmatprep.subr.mxu0 0.0
    %95 = vmatpush1.msra.mxu0 0.0
    %96 = vmatprep.subr.mxu0 0.0
    %97 = vmatpush1.msra.mxu0 0.0
    %98 = vmatprep.subr.mxu0 0.0
    %99 = vmatpush1.msra.mxu0 0.0
    %100 = vmatprep.subr.mxu0 0.0
    %101 = vmatpush1.msra.mxu0 0.0
    %102 = vmatprep.mubr.f32.mxu0 0.0
    %103 = vmatmul.mubr.f32.gmra.mrb[0].mxu0 %v32
    %v104 = vpop.f32.mrb[0].mxu0
    %v105 = vadd.f32 %v28, %v104
    %v106 = vpop.f32.mrb[0].mxu0
    %107 = vdwg.mxu0
    %v108 = vmax.f32 %v105, 0.0
    %v109 = vld [vmem:[%s3] sm:$0xff]
    %v110 = vld [vmem:[%s3 + $0x8] sm:$0xff]
    %v111 = vld [vmem:[%s3 + $0x10] sm:$0xff]
    %v112 = vld [vmem:[%s3 + $0x18] sm:$0xff]
    %v113 = vld [vmem:[%s3 + $0x20] sm:$0xff]
    %v114 = vld [vmem:[%s3 + $0x28] sm:$0xff]
    %v115 = vld [vmem:[%s3 + $0x30] sm:$0xff]
    %v116 = vld [vmem:[%s3 + $0x38] sm:$0xff]
    %v117 = vld [vmem:[%s3 + $0x40] sm:$0xff]
    %v118 = vld [vmem:[%s3 + $0x48] sm:$0xff]
    %v119 = vld [vmem:[%s3 + $0x50] sm:$0xff]
    %v120 = vld [vmem:[%s3 + $0x58] sm:$0xff]
    %v121 = vld [vmem:[%s3 + $0x60] sm:$0xff]
    %v122 = vld [vmem:[%s3 + $0x68] sm:$0xff]
    %v123 = vld [vmem:[%s3 + $0x70] sm:$0xff]
    %v124 = vld [vmem:[%s3 + $0x78] sm:$0xff]
    %v125 = vld [vmem:[%s4] sm:$0x1]
    %v127 = vlaneseq
    %v128 = vshrl.u32 %v127, 7
    %v129 = vsub.s32 0, %v128
    %v130 = vrot.slane %v125, %v129
    %132 = vmatprep.subr.mxu0 0.0
    %133 = vmatpush1.msra.mxu0 %v109
    %134 = vmatprep.subr.mxu0 0.0
    %135 = vmatpush1.msra.mxu0 %v110
    %136 = vmatprep.subr.mxu0 0.0
    %137 = vmatpush1.msra.mxu0 %v111
    %138 = vmatprep.subr.mxu0 0.0
    %139 = vmatpush1.msra.mxu0 %v112
    %140 = vmatprep.subr.mxu0 0.0
    %141 = vmatpush1.msra.mxu0 %v113
    %142 = vmatprep.subr.mxu0 0.0
    %143 = vmatpush1.msra.mxu0 %v114
    %144 = vmatprep.subr.mxu0 0.0
    %145 = vmatpush1.msra.mxu0 %v115
    %146 = vmatprep.subr.mxu0 0.0
    %147 = vmatpush1.msra.mxu0 %v116
    %148 = vmatprep.subr.mxu0 0.0
    %149 = vmatpush1.msra.mxu0 %v117
    %150 = vmatprep.subr.mxu0 0.0
    %151 = vmatpush1.msra.mxu0 %v118
    %152 = vmatprep.subr.mxu0 0.0
    %153 = vmatpush1.msra.mxu0 %v119
    %154 = vmatprep.subr.mxu0 0.0
    %155 = vmatpush1.msra.mxu0 %v120
    %156 = vmatprep.subr.mxu0 0.0
    %157 = vmatpush1.msra.mxu0 %v121
    %158 = vmatprep.subr.mxu0 0.0
    %159 = vmatpush1.msra.mxu0 %v122
    %160 = vmatprep.subr.mxu0 0.0
    %161 = vmatpush1.msra.mxu0 %v123
    %162 = vmatprep.subr.mxu0 0.0
    %163 = vmatpush1.msra.mxu0 %v124
    %164 = vmatprep.subr.mxu0 0.0
    %165 = vmatpush1.msra.mxu0 0.0
    %166 = vmatprep.subr.mxu0 0.0
    %167 = vmatpush1.msra.mxu0 0.0
    %168 = vmatprep.subr.mxu0 0.0
    %169 = vmatpush1.msra.mxu0 0.0
    %170 = vmatprep.subr.mxu0 0.0
    %171 = vmatpush1.msra.mxu0 0.0
    %172 = vmatprep.subr.mxu0 0.0
    %173 = vmatpush1.msra.mxu0 0.0
    %174 = vmatprep.subr.mxu0 0.0
    %175 = vmatpush1.msra.mxu0 0.0
    %176 = vmatprep.subr.mxu0 0.0
    %177 = vmatpush1.msra.mxu0 0.0
    %178 = vmatprep.subr.mxu0 0.0
    %179 = vmatpush1.msra.mxu0 0.0
    %180 = vmatprep.subr.mxu0 0.0
    %181 = vmatpush1.msra.mxu0 0.0
    %182 = vmatprep.subr.mxu0 0.0
    %183 = vmatpush1.msra.mxu0 0.0
    %184 = vmatprep.subr.mxu0 0.0
    %185 = vmatpush1.msra.mxu0 0.0
    %186 = vmatprep.subr.mxu0 0.0
    %187 = vmatpush1.msra.mxu0 0.0
    %188 = vmatprep.subr.mxu0 0.0
    %189 = vmatpush1.msra.mxu0 0.0
    %190 = vmatprep.subr.mxu0 0.0
    %191 = vmatpush1.msra.mxu0 0.0
    %192 = vmatprep.subr.mxu0 0.0
    %193 = vmatpush1.msra.mxu0 0.0
    %194 = vmatprep.subr.mxu0 0.0
    %195 = vmatpush1.msra.mxu0 0.0
    %196 = vmatprep.mubr.f32.mxu0 0.0
    %197 = vmatmul.mubr.f32.gmra.mrb[0].mxu0 %v108
    %v198 = vpop.f32.mrb[0].mxu0
    %v199 = vadd.f32 %v130, %v198
    %v200 = vpop.f32.mrb[0].mxu0
    %201 = vdwg.mxu0
    %v202 = vlaneseq
    %v203 = vand.u32 %v202, 127
    %vm204 = vcmp.lt.s32.totalorder %v203, 2
    %v205 = vsel %vm204, 1, 0
    %vm206 = vcmp.eq.s32.totalorder %v205, 1
    %v207 = vsel %vm206, %v199, -inf
    %vm208 = vcmask 64512
    %v209 = vsel %vm208, %v207, -inf
    %210 = vmax.xlane.f32.xlu0 %v209
    %v211 = vpop.xlane.xlu0 %210
    %v212 = vsub.f32 %v199, %v211
    %v213 = vsel %vm206, %v212, -inf
    %v214 = vmul.f32 %v213, 1.442695
    %v215 = vpow.pop %v214
    %v216 = vsel %vm208, %v215, 0.0
    %217 = vadd.xlane.f32.xlu0 %v216
    %v218 = vpop.xlane.xlu0 %217
    %v219 = vrcp.pop %v218
    %v220 = vmul.f32 %v215, %v219
    %v221 = vsel %vm206, %v220, %v199
    %222 = vst.msk [vmem:[#allocation2] sm:$0xff] %vm208, %v221
    // Predicated region
    $region22: #{tpu_custom_call.1} parent=1 // pred_check
      _
    $region23: #{tpu_custom_call.1} parent=1 // pred_check_branch
      %224 = sbr.rel (0) target = $region25
    $region24: #{tpu_custom_call.1} parent=1 // pred_region
      %s226 = ssub.s32 128, 128
      %227 = vsyncadd [#allocation3], %s226
      %s229 = sshll.u32 [#allocation2], 4
      %s230 = int_to_ptr.vmem [resolvable:$true] %s229
      %232 = dma.vmem_to_hbm [thread:$0]  %s230, 128, %s5, [#allocation3]
    $region25: #{tpu_custom_call.1} parent=1 // pred_fallthru
      _
    // Predicated region
    $region26: #{tpu_custom_call.1} parent=1 // pred_check
      _
    $region27: #{tpu_custom_call.1} parent=1 // pred_check_branch
      %234 = sbr.rel (0) target = $region29
    $region28: #{tpu_custom_call.1} parent=1 // pred_region
      %235 = dma.done [#allocation3], 128
    $region29: #{tpu_custom_call.1} parent=1 // pred_fallthru
      _
    %236 = vsyncpa [#allocation3], 1

</llo_original>
